<compile_context>
chip_gen: v7x
topology: tpu7x:2x2x1
jax: 0.10.0
libtpu: 0.0.40
codegen_flags: <defaults>
</compile_context>

<pallas_src>
import math

import jax
import jax.numpy as jnp
from jax.experimental import pallas as pl
from jax.experimental.pallas import tpu as pltpu


def _policy_kernel(action_bound, action_dim):
    log_sqrt_2pi = 0.5 * math.log(2.0 * math.pi)

    def kernel(x_ref, w1t_ref, b1_ref, wht_ref, bht_ref, eps_ref, out_ref):
        # Batch is on the lane (last) axis: every tile is [feature, tb].
        x = x_ref[...]                                                   # [S, tb]

        # fc1 + ReLU -> [hidden, tb]
        h = jnp.dot(w1t_ref[...], x, preferred_element_type=jnp.float32) + b1_ref[...]
        h = jnp.maximum(h, 0.0)

        # fused mu/std head -> [2A, tb]
        y = jnp.dot(wht_ref[...], h, preferred_element_type=jnp.float32) + bht_ref[...]
        mu = y[:action_dim, :]
        std = jnp.logaddexp(y[action_dim:, :], 0.0)                      # softplus

        # reparameterized sample; (sample - mu)/std == eps exactly, so the
        # Normal log-prob needs no divide/subtract.
        eps = eps_ref[...]                                               # [A, tb]
        sample = mu + std * eps
        log_prob = -0.5 * eps * eps - jnp.log(std) - log_sqrt_2pi

        # tanh squash + bound (matches the torch code exactly, including tanh
        # of the *scaled* action inside the correction term and the +1e-7).
        action = jnp.tanh(sample) * action_bound
        log_prob = log_prob - jnp.log(1.0 - jnp.tanh(action) ** 2 + 1e-7)

        # Direct sub-stores: no lane/sublane concat before the writeback.
        out_ref[:action_dim, :] = action
        out_ref[action_dim:, :] = log_prob

    return kernel


def _pick_batch_tile(B, batch_tile, min_grid_steps):
    """Lane-aligned batch tile; >=2 grid steps for large B (v7x megacore)."""
    if B < 128:
        return B                       # single full-extent block (lane dim == array dim)
    per_step = -(-B // min_grid_steps)            # ceil(B / min_grid_steps)
    tb = ((per_step + 127) // 128) * 128          # round up to lane multiple
    tb = min(tb, batch_tile)
    tb = min(tb, ((B + 127) // 128) * 128)        # never exceed padded batch
    return max(tb, 128)


def policy_net_continuous(x, params, eps, action_bound, *,
                          batch_tile=8192, min_grid_steps=2):
    """Forward pass of PolicyNetContinuous.

    x:   [B, state_dim] float32
    eps: [B, action_dim] standard-normal noise (reparameterization trick)
    params: 'w1' [S,H], 'b1' [1,H], 'wmu'/'wstd' [H,A], 'bmu'/'bstd' [1,A]
    returns: (action [B, A], log_prob [B, A])

    Note: for B <~ 256 a plain-XLA path (see _reference) would beat the fixed
    Pallas launch/DMA latency; kept on the Pallas path here so the kernel is
    always exercised.
    """
    B, state_dim = x.shape
    hidden = params["w1"].shape[1]
    A = params["wmu"].shape[1]

    # Lay the problem out with batch on the lane axis (one-time transposes /
    # concats in the wrapper; tiny compared to the kernel payload).
    x_t = x.T                                                # [S, B]
    eps_t = eps.T                                            # [A, B]
    w1_t = params["w1"].T                                    # [H, S]
    b1_t = params["b1"].reshape(hidden, 1)                   # [H, 1]
    w_head_t = jnp.concatenate(
        [params["wmu"].T, params["wstd"].T], axis=0)         # [2A, H]
    b_head_t = jnp.concatenate(
        [params["bmu"].reshape(A, 1), params["bstd"].reshape(A, 1)], axis=0)  # [2A, 1]

    tb = _pick_batch_tile(B, batch_tile, min_grid_steps)
    grid = (pl.cdiv(B, tb),)

    out = pl.pallas_call(
        _policy_kernel(action_bound, A),
        out_shape=jax.ShapeDtypeStruct((2 * A, B), jnp.float32),
        grid=grid,
        in_specs=[
            pl.BlockSpec((state_dim, tb), lambda i: (0, i)),      # x^T   (blocked on batch)
            pl.BlockSpec((hidden, state_dim), lambda i: (0, 0)),  # w1^T  (VMEM-resident)
            pl.BlockSpec((hidden, 1), lambda i: (0, 0)),          # b1
            pl.BlockSpec((2 * A, hidden), lambda i: (0, 0)),      # fused head W^T
            pl.BlockSpec((2 * A, 1), lambda i: (0, 0)),           # fused head b
            pl.BlockSpec((A, tb), lambda i: (0, i)),              # eps^T (blocked on batch)
        ],
        out_specs=pl.BlockSpec((2 * A, tb), lambda i: (0, i)),
        compiler_params=pltpu.CompilerParams(
            dimension_semantics=("parallel",)),
    )(x_t, w1_t, b1_t, w_head_t, b_head_t, eps_t)

    action = out[:A, :].T
    log_prob = out[A:, :].T
    return action, log_prob


def init_params(key, state_dim, hidden_dim, action_dim):
    """Deterministic parameter init (torch.nn.Linear style uniform bounds)."""
    ks = jax.random.split(key, 6)

    def unif(k, shape, fan_in):
        bound = 1.0 / math.sqrt(fan_in)
        return jax.random.uniform(k, shape, jnp.float32, -bound, bound)

    return {
        # stored as [in, out] (transposed w.r.t. PyTorch's [out, in])
        "w1": unif(ks[0], (state_dim, hidden_dim), state_dim),
        "b1": unif(ks[1], (1, hidden_dim), state_dim),
        "wmu": unif(ks[2], (hidden_dim, action_dim), hidden_dim),
        "bmu": unif(ks[3], (1, action_dim), hidden_dim),
        "wstd": unif(ks[4], (hidden_dim, action_dim), hidden_dim),
        "bstd": unif(ks[5], (1, action_dim), hidden_dim),
    }


def _reference(x, params, eps, action_bound):
    h = jax.nn.relu(x @ params["w1"] + params["b1"])
    mu = h @ params["wmu"] + params["bmu"]
    std = jax.nn.softplus(h @ params["wstd"] + params["bstd"])
    sample = mu + std * eps
    log_prob = (-0.5 * ((sample - mu) / std) ** 2 - jnp.log(std)
                - 0.5 * math.log(2.0 * math.pi))
    action = jnp.tanh(sample) * action_bound
    log_prob = log_prob - jnp.log(1.0 - jnp.tanh(action) ** 2 + 1e-7)
    return action, log_prob


if __name__ == "__main__":
    state_dim = 16
    hidden_dim = 32
    action_dim = 4
    action_bound = 2.0

    key = jax.random.PRNGKey(0)
    k_params, k_rest = jax.random.split(key)
    params = init_params(k_params, state_dim, hidden_dim, action_dim)

    # TODO(synk): torch's dist.rsample() RNG stream is replaced by explicit
    # jax.random.normal noise passed into the kernel (reparameterization).
    for batch, mgs in ((8, 2), (500, 2)):   # tiny demo + ragged multi-step grid
        k_x, k_eps, k_rest = jax.random.split(k_rest, 3)
        x = jax.random.normal(k_x, (batch, state_dim), dtype=jnp.float32)
        eps = jax.random.normal(k_eps, (batch, action_dim), dtype=jnp.float32)

        action, log_prob = policy_net_continuous(
            x, params, eps, action_bound, min_grid_steps=mgs)
        jax.block_until_ready((action, log_prob))

        ref_action, ref_log_prob = _reference(x, params, eps, action_bound)
        assert jnp.allclose(action, ref_action, atol=1e-5, rtol=1e-5)
        assert jnp.allclose(log_prob, ref_log_prob, atol=1e-4, rtol=1e-4)

    print("KERNEL_OK")
</pallas_src>

<mosaic_0001>
module attributes {stable_mosaic.version = 11 : i64} {
  func.func @kernel(%arg0: i32, %arg1: memref<16x8xf32, #tpu.memory_space<vmem>>, %arg2: memref<32x16xf32, #tpu.memory_space<vmem>>, %arg3: memref<32x1xf32, #tpu.memory_space<vmem>>, %arg4: memref<8x32xf32, #tpu.memory_space<vmem>>, %arg5: memref<8x1xf32, #tpu.memory_space<vmem>>, %arg6: memref<4x8xf32, #tpu.memory_space<vmem>>, %arg7: memref<8x8xf32, #tpu.memory_space<vmem>>) attributes {dimension_semantics = [#tpu.dimension_semantics<parallel>], iteration_bounds = array<i64: 1>, scalar_prefetch = 0 : i64, scratch_operands = 0 : i64, tpu.core_type = #tpu.core_type<tc>, window_params = [{transform_indices = @transform_0, window_bounds = array<i64: 16, 8>}, {pipeline_mode = #tpu.pipeline_mode<synchronous>, transform_indices = @transform_1, window_bounds = array<i64: 32, 16>}, {pipeline_mode = #tpu.pipeline_mode<synchronous>, transform_indices = @transform_2, window_bounds = array<i64: 32, 1>}, {pipeline_mode = #tpu.pipeline_mode<synchronous>, transform_indices = @transform_3, window_bounds = array<i64: 8, 32>}, {pipeline_mode = #tpu.pipeline_mode<synchronous>, transform_indices = @transform_4, window_bounds = array<i64: 8, 1>}, {transform_indices = @transform_5, window_bounds = array<i64: 4, 8>}, {transform_indices = @transform_6, window_bounds = array<i64: 8, 8>}]} {
    %c0 = arith.constant 0 : index
    %c0_0 = arith.constant 0 : index
    %0 = vector.load %arg1[%c0, %c0_0] : memref<16x8xf32, #tpu.memory_space<vmem>>, vector<16x8xf32>
    %c0_1 = arith.constant 0 : index
    %c0_2 = arith.constant 0 : index
    %1 = vector.load %arg2[%c0_1, %c0_2] : memref<32x16xf32, #tpu.memory_space<vmem>>, vector<32x16xf32>
    %cst = arith.constant dense<0.000000e+00> : vector<32x8xf32>
    %2 = tpu.matmul %1, %0, %cst {dimension_numbers = #tpu.dot_dimension_numbers<[1], [0], [0], [1], [0, 0, 1, 1], [], []>} : vector<32x16xf32>, vector<16x8xf32>, vector<32x8xf32> -> vector<32x8xf32>
    %c0_3 = arith.constant 0 : index
    %c0_4 = arith.constant 0 : index
    %3 = vector.load %arg3[%c0_3, %c0_4] : memref<32x1xf32, #tpu.memory_space<vmem>>, vector<32x1xf32>
    %4 = vector.broadcast %3 : vector<32x1xf32> to vector<32x8xf32>
    %5 = arith.addf %2, %4 : vector<32x8xf32>
    %cst_5 = arith.constant 0.000000e+00 : f32
    %6 = vector.broadcast %cst_5 : f32 to vector<32x8xf32>
    %7 = arith.maximumf %5, %6 : vector<32x8xf32>
    %c0_6 = arith.constant 0 : index
    %c0_7 = arith.constant 0 : index
    %8 = vector.load %arg4[%c0_6, %c0_7] : memref<8x32xf32, #tpu.memory_space<vmem>>, vector<8x32xf32>
    %cst_8 = arith.constant dense<0.000000e+00> : vector<8x8xf32>
    %9 = tpu.matmul %8, %7, %cst_8 {dimension_numbers = #tpu.dot_dimension_numbers<[1], [0], [0], [1], [0, 0, 1, 1], [], []>} : vector<8x32xf32>, vector<32x8xf32>, vector<8x8xf32> -> vector<8x8xf32>
    %c0_9 = arith.constant 0 : index
    %c0_10 = arith.constant 0 : index
    %10 = vector.load %arg5[%c0_9, %c0_10] : memref<8x1xf32, #tpu.memory_space<vmem>>, vector<8x1xf32>
    %11 = vector.broadcast %10 : vector<8x1xf32> to vector<8x8xf32>
    %12 = arith.addf %9, %11 : vector<8x8xf32>
    %13 = vector.extract_strided_slice %12 {offsets = [0, 0], sizes = [4, 8], strides = [1, 1]} : vector<8x8xf32> to vector<4x8xf32>
    %14 = vector.extract_strided_slice %12 {offsets = [4, 0], sizes = [4, 8], strides = [1, 1]} : vector<8x8xf32> to vector<4x8xf32>
    %cst_11 = arith.constant 0.000000e+00 : f32
    %15 = vector.broadcast %cst_11 : f32 to vector<4x8xf32>
    %16 = arith.maximumf %14, %15 : vector<4x8xf32>
    %17 = vector.broadcast %cst_11 : f32 to vector<4x8xf32>
    %18 = arith.subf %14, %17 : vector<4x8xf32>
    %19 = arith.cmpf one, %18, %18 : vector<4x8xf32>
    %20 = vector.broadcast %cst_11 : f32 to vector<4x8xf32>
    %21 = arith.addf %14, %20 : vector<4x8xf32>
    %22 = math.absf %18 : vector<4x8xf32>
    %cst_12 = arith.constant 0.000000e+00 : f32
    %23 = vector.broadcast %cst_12 : f32 to vector<4x8xf32>
    %24 = arith.subf %23, %22 : vector<4x8xf32>
    %25 = math.exp %24 : vector<4x8xf32>
    %26 = math.log1p %25 : vector<4x8xf32>
    %27 = arith.addf %16, %26 : vector<4x8xf32>
    %28 = arith.select %19, %21, %27 : vector<4x8xi1>, vector<4x8xf32>
    %c0_13 = arith.constant 0 : index
    %c0_14 = arith.constant 0 : index
    %29 = vector.load %arg6[%c0_13, %c0_14] : memref<4x8xf32, #tpu.memory_space<vmem>>, vector<4x8xf32>
    %30 = arith.mulf %28, %29 : vector<4x8xf32>
    %31 = arith.addf %13, %30 : vector<4x8xf32>
    %cst_15 = arith.constant -5.000000e-01 : f32
    %32 = vector.broadcast %cst_15 : f32 to vector<4x8xf32>
    %33 = arith.mulf %32, %29 : vector<4x8xf32>
    %34 = arith.mulf %33, %29 : vector<4x8xf32>
    %35 = math.log %28 : vector<4x8xf32>
    %36 = arith.subf %34, %35 : vector<4x8xf32>
    %cst_16 = arith.constant 0.918938517 : f32
    %37 = vector.broadcast %cst_16 : f32 to vector<4x8xf32>
    %38 = arith.subf %36, %37 : vector<4x8xf32>
    %39 = math.tanh %31 : vector<4x8xf32>
    %cst_17 = arith.constant 2.000000e+00 : f32
    %40 = vector.broadcast %cst_17 : f32 to vector<4x8xf32>
    %41 = arith.mulf %39, %40 : vector<4x8xf32>
    %42 = math.tanh %41 : vector<4x8xf32>
    %43 = arith.mulf %42, %42 : vector<4x8xf32>
    %cst_18 = arith.constant 1.000000e+00 : f32
    %44 = vector.broadcast %cst_18 : f32 to vector<4x8xf32>
    %45 = arith.subf %44, %43 : vector<4x8xf32>
    %cst_19 = arith.constant 1.000000e-07 : f32
    %46 = vector.broadcast %cst_19 : f32 to vector<4x8xf32>
    %47 = arith.addf %45, %46 : vector<4x8xf32>
    %48 = math.log %47 : vector<4x8xf32>
    %49 = arith.subf %38, %48 : vector<4x8xf32>
    %c0_20 = arith.constant 0 : index
    %c0_21 = arith.constant 0 : index
    %50 = vector.load %arg7[%c0_20, %c0_21] : memref<8x8xf32, #tpu.memory_space<vmem>>, vector<4x8xf32>
    tpu.vector_store %arg7[%c0_20, %c0_21], %41 {strides = array<i32>} : memref<8x8xf32, #tpu.memory_space<vmem>>, vector<4x8xf32>,
    %c4 = arith.constant 4 : index
    %c0_22 = arith.constant 0 : index
    %51 = vector.load %arg7[%c4, %c0_22] : memref<8x8xf32, #tpu.memory_space<vmem>>, vector<4x8xf32>
    tpu.vector_store %arg7[%c4, %c0_22], %49 {strides = array<i32>} : memref<8x8xf32, #tpu.memory_space<vmem>>, vector<4x8xf32>,
    return
  }
  func.func @transform_0(%arg0: i32) -> (i32, i32) {
    %c0_i32 = arith.constant 0 : i32
    %c0_i32_0 = arith.constant 0 : i32
    return %c0_i32, %arg0 : i32, i32
  }
  func.func @transform_1(%arg0: i32) -> (i32, i32) {
    %c0_i32 = arith.constant 0 : i32
    %c0_i32_0 = arith.constant 0 : i32
    %c0_i32_1 = arith.constant 0 : i32
    return %c0_i32, %c0_i32_0 : i32, i32
  }
  func.func @transform_2(%arg0: i32) -> (i32, i32) {
    %c0_i32 = arith.constant 0 : i32
    %c0_i32_0 = arith.constant 0 : i32
    %c0_i32_1 = arith.constant 0 : i32
    return %c0_i32, %c0_i32_0 : i32, i32
  }
  func.func @transform_3(%arg0: i32) -> (i32, i32) {
    %c0_i32 = arith.constant 0 : i32
    %c0_i32_0 = arith.constant 0 : i32
    %c0_i32_1 = arith.constant 0 : i32
    return %c0_i32, %c0_i32_0 : i32, i32
  }
  func.func @transform_4(%arg0: i32) -> (i32, i32) {
    %c0_i32 = arith.constant 0 : i32
    %c0_i32_0 = arith.constant 0 : i32
    %c0_i32_1 = arith.constant 0 : i32
    return %c0_i32, %c0_i32_0 : i32, i32
  }
  func.func @transform_5(%arg0: i32) -> (i32, i32) {
    %c0_i32 = arith.constant 0 : i32
    %c0_i32_0 = arith.constant 0 : i32
    return %c0_i32, %arg0 : i32, i32
  }
  func.func @transform_6(%arg0: i32) -> (i32, i32) {
    %c0_i32 = arith.constant 0 : i32
    %c0_i32_0 = arith.constant 0 : i32
    return %c0_i32, %arg0 : i32, i32
  }
}

</mosaic_0001>

<llo_original>
// kernel: tpu_custom_call.1
$region0: #{tpu_custom_call.1}
  #allocation0 [shape = 'u32[]', space=smem, size = 0x4, offset = 0x4, fixed_abs, tag = 'smem constant byte address 0x4 - core index']
  #allocation1 [shape = 'u32[144,128]{1,0:T(1,128)}', space=vmem, size = 0x12000, scoped, tag = 'internal scratch']
  %s0 = inlined_call_operand.vmem [shape: f32[16,8], index: 0, kind: input, shape index: {}]
  %s1 = inlined_call_operand.vmem [shape: f32[32,16], index: 1, kind: input, shape index: {}]
  %s2 = inlined_call_operand.vmem [shape: f32[32,1], index: 2, kind: input, shape index: {}]
  %s3 = inlined_call_operand.vmem [shape: f32[8,32], index: 3, kind: input, shape index: {}]
  %s4 = inlined_call_operand.vmem [shape: f32[8,1], index: 4, kind: input, shape index: {}]
  %s5 = inlined_call_operand.vmem [shape: f32[4,8], index: 5, kind: input, shape index: {}]
  %s6 = inlined_call_operand.hbm [shape: f32[8,8], index: 6, kind: output, shape index: {}]
  %s7 = sld [smem:[#allocation0]]
  $region34: #{tpu_custom_call.1} parent=0
    _
  %s9 = ssub.s32 1, %s7
  %s10 = scalar_select 0, %s9, %s7
  $region1: #{tpu_custom_call.1} parent=0
    #allocation2 [shape = 'u8[4096]{0}', space=vmem, size = 0x1000, scoped, tag = 'output window, operand 0, single buffered']
    #allocation3 [shape = 's32[1]{0}', space=sflag, size = 0x4, scoped, tag = 'scoped memory for tpu_custom_call.1']
    %11 = vsyncpa [#allocation3], 0
    // Predicated region
    $region2: #{tpu_custom_call.1} parent=1 // pred_check
      _
    $region3: #{tpu_custom_call.1} parent=1 // pred_check_branch
      %13 = sbr.rel (0) target = $region5
    $region4: #{tpu_custom_call.1} parent=1 // pred_region
      _
    $region5: #{tpu_custom_call.1} parent=1 // pred_fallthru
      _
    // Predicated region
    $region6: #{tpu_custom_call.1} parent=1 // pred_check
      _
    $region7: #{tpu_custom_call.1} parent=1 // pred_check_branch
      %15 = sbr.rel (0) target = $region9
    $region8: #{tpu_custom_call.1} parent=1 // pred_region
      _
    $region9: #{tpu_custom_call.1} parent=1 // pred_fallthru
      _
    // Predicated region
    $region10: #{tpu_custom_call.1} parent=1 // pred_check
      _
    $region11: #{tpu_custom_call.1} parent=1 // pred_check_branch
      %17 = sbr.rel (0) target = $region13
    $region12: #{tpu_custom_call.1} parent=1 // pred_region
      _
    $region13: #{tpu_custom_call.1} parent=1 // pred_fallthru
      _
    // Predicated region
    $region14: #{tpu_custom_call.1} parent=1 // pred_check
      _
    $region15: #{tpu_custom_call.1} parent=1 // pred_check_branch
      %19 = sbr.rel (0) target = $region17
    $region16: #{tpu_custom_call.1} parent=1 // pred_region
      _
    $region17: #{tpu_custom_call.1} parent=1 // pred_fallthru
      _
    // Predicated region
    $region18: #{tpu_custom_call.1} parent=1 // pred_check
      _
    $region19: #{tpu_custom_call.1} parent=1 // pred_check_branch
      %21 = sbr.rel (0) target = $region21
    $region20: #{tpu_custom_call.1} parent=1 // pred_region
      _
    $region21: #{tpu_custom_call.1} parent=1 // pred_fallthru
      _
    // Predicated region
    $region22: #{tpu_custom_call.1} parent=1 // pred_check
      _
    $region23: #{tpu_custom_call.1} parent=1 // pred_check_branch
      %23 = sbr.rel (0) target = $region25
    $region24: #{tpu_custom_call.1} parent=1 // pred_region
      _
    $region25: #{tpu_custom_call.1} parent=1 // pred_fallthru
      _
    %v24 = vld [vmem:[%s0] sm:$0xff]
    %v25 = vld [vmem:[%s0 + $0x8] sm:$0xff]
    %v26 = vld [vmem:[%s1] sm:$0xff]
    %v27 = vld [vmem:[%s1 + $0x8] sm:$0xff]
    %v28 = vld [vmem:[%s1 + $0x10] sm:$0xff]
    %v29 = vld [vmem:[%s1 + $0x18] sm:$0xff]
    %v30 = vld [vmem:[%s2] sm:$0xff]
    %v31 = vld [vmem:[%s2 + $0x8] sm:$0xff]
    %v32 = vld [vmem:[%s2 + $0x10] sm:$0xff]
    %v33 = vld [vmem:[%s2 + $0x18] sm:$0xff]
    %35 = vset.pattern.permute.xlu0 0
    %36 = vperm.xlu0 %35, %v30
    %v37 = vpop.permute.xlu0 %36
    %40 = vset.pattern.permute.xlu0 0
    %41 = vperm.xlu0 %40, %v31
    %v42 = vpop.permute.xlu0 %41
    %45 = vset.pattern.permute.xlu0 0
    %46 = vperm.xlu0 %45, %v32
    %v47 = vpop.permute.xlu0 %46
    %50 = vset.pattern.permute.xlu0 0
    %51 = vperm.xlu0 %50, %v33
    %v52 = vpop.permute.xlu0 %51
    %vm54 = vcmask 130048
    %v56 = vsel %vm54, %v26, 0
    %v59 = vsel %vm54, %v27, 0
    %v62 = vsel %vm54, %v28, 0
    %v65 = vsel %vm54, %v29, 0
    %67 = vmatprep.subr.mxu0 0.0
    %68 = vmatpush1.msra.mxu0 %v24
    %69 = vmatprep.subr.mxu0 0.0
    %70 = vmatpush1.msra.mxu0 %v25
    %71 = vmatprep.subr.mxu0 0.0
    %72 = vmatpush1.msra.mxu0 0.0
    %73 = vmatprep.subr.mxu0 0.0
    %74 = vmatpush1.msra.mxu0 0.0
    %75 = vmatprep.subr.mxu0 0.0
    %76 = vmatpush1.msra.mxu0 0.0
    %77 = vmatprep.subr.mxu0 0.0
    %78 = vmatpush1.msra.mxu0 0.0
    %79 = vmatprep.subr.mxu0 0.0
    %80 = vmatpush1.msra.mxu0 0.0
    %81 = vmatprep.subr.mxu0 0.0
    %82 = vmatpush1.msra.mxu0 0.0
    %83 = vmatprep.subr.mxu0 0.0
    %84 = vmatpush1.msra.mxu0 0.0
    %85 = vmatprep.subr.mxu0 0.0
    %86 = vmatpush1.msra.mxu0 0.0
    %87 = vmatprep.subr.mxu0 0.0
    %88 = vmatpush1.msra.mxu0 0.0
    %89 = vmatprep.subr.mxu0 0.0
    %90 = vmatpush1.msra.mxu0 0.0
    %91 = vmatprep.subr.mxu0 0.0
    %92 = vmatpush1.msra.mxu0 0.0
    %93 = vmatprep.subr.mxu0 0.0
    %94 = vmatpush1.msra.mxu0 0.0
    %95 = vmatprep.subr.mxu0 0.0
    %96 = vmatpush1.msra.mxu0 0.0
    %97 = vmatprep.subr.mxu0 0.0
    %98 = vmatpush1.msra.mxu0 0.0
    %99 = vmatprep.subr.mxu0 0.0
    %100 = vmatpush1.msra.mxu0 0.0
    %101 = vmatprep.subr.mxu0 0.0
    %102 = vmatpush1.msra.mxu0 0.0
    %103 = vmatprep.subr.mxu0 0.0
    %104 = vmatpush1.msra.mxu0 0.0
    %105 = vmatprep.subr.mxu0 0.0
    %106 = vmatpush1.msra.mxu0 0.0
    %107 = vmatprep.subr.mxu0 0.0
    %108 = vmatpush1.msra.mxu0 0.0
    %109 = vmatprep.subr.mxu0 0.0
    %110 = vmatpush1.msra.mxu0 0.0
    %111 = vmatprep.subr.mxu0 0.0
    %112 = vmatpush1.msra.mxu0 0.0
    %113 = vmatprep.subr.mxu0 0.0
    %114 = vmatpush1.msra.mxu0 0.0
    %115 = vmatprep.subr.mxu0 0.0
    %116 = vmatpush1.msra.mxu0 0.0
    %117 = vmatprep.subr.mxu0 0.0
    %118 = vmatpush1.msra.mxu0 0.0
    %119 = vmatprep.subr.mxu0 0.0
    %120 = vmatpush1.msra.mxu0 0.0
    %121 = vmatprep.subr.mxu0 0.0
    %122 = vmatpush1.msra.mxu0 0.0
    %123 = vmatprep.subr.mxu0 0.0
    %124 = vmatpush1.msra.mxu0 0.0
    %125 = vmatprep.subr.mxu0 0.0
    %126 = vmatpush1.msra.mxu0 0.0
    %127 = vmatprep.subr.mxu0 0.0
    %128 = vmatpush1.msra.mxu0 0.0
    %129 = vmatprep.subr.mxu0 0.0
    %130 = vmatpush1.msra.mxu0 0.0
    %131 = vmatprep.mubr.f32.mxu0 0.0
    %132 = vmatmul.mubr.f32.gmra.mrb[0].mxu0 %v56
    %v133 = vpop.f32.mrb[0].mxu0
    %v134 = vadd.f32 %v37, %v133
    %v135 = vpop.f32.mrb[0].mxu0
    %136 = vmatprep.mubr.f32.mxu0 0.0
    %137 = vmatmul.mubr.f32.gmra.mrb[0].mxu0 %v59
    %v138 = vpop.f32.mrb[0].mxu0
    %v139 = vadd.f32 %v42, %v138
    %v140 = vpop.f32.mrb[0].mxu0
    %141 = vmatprep.mubr.f32.mxu0 0.0
    %142 = vmatmul.mubr.f32.gmra.mrb[0].mxu0 %v62
    %v143 = vpop.f32.mrb[0].mxu0
    %v144 = vadd.f32 %v47, %v143
    %v145 = vpop.f32.mrb[0].mxu0
    %146 = vmatprep.mubr.f32.mxu0 0.0
    %147 = vmatmul.mubr.f32.gmra.mrb[0].mxu0 %v65
    %v148 = vpop.f32.mrb[0].mxu0
    %v149 = vadd.f32 %v52, %v148
    %v150 = vpop.f32.mrb[0].mxu0
    %151 = vdwg.mxu0
    %v152 = vmax.f32 %v134, 0.0
    %v153 = vmax.f32 %v139, 0.0
    %v154 = vmax.f32 %v144, 0.0
    %v155 = vmax.f32 %v149, 0.0
    %v156 = vld [vmem:[%s3] sm:$0xff]
    %v157 = vld [vmem:[%s4] sm:$0xff]
    %159 = vset.pattern.permute.xlu0 0
    %160 = vperm.xlu0 %159, %v157
    %v161 = vpop.permute.xlu0 %160
    %vm163 = vcmask 261120
    %v165 = vsel %vm163, %v156, 0
    %167 = vmatprep.subr.mxu0 0.0
    %168 = vmatpush1.msra.mxu0 %v152
    %169 = vmatprep.subr.mxu0 0.0
    %170 = vmatpush1.msra.mxu0 %v153
    %171 = vmatprep.subr.mxu0 0.0
    %172 = vmatpush1.msra.mxu0 %v154
    %173 = vmatprep.subr.mxu0 0.0
    %174 = vmatpush1.msra.mxu0 %v155
    %175 = vmatprep.subr.mxu0 0.0
    %176 = vmatpush1.msra.mxu0 0.0
    %177 = vmatprep.subr.mxu0 0.0
    %178 = vmatpush1.msra.mxu0 0.0
    %179 = vmatprep.subr.mxu0 0.0
    %180 = vmatpush1.msra.mxu0 0.0
    %181 = vmatprep.subr.mxu0 0.0
    %182 = vmatpush1.msra.mxu0 0.0
    %183 = vmatprep.subr.mxu0 0.0
    %184 = vmatpush1.msra.mxu0 0.0
    %185 = vmatprep.subr.mxu0 0.0
    %186 = vmatpush1.msra.mxu0 0.0
    %187 = vmatprep.subr.mxu0 0.0
    %188 = vmatpush1.msra.mxu0 0.0
    %189 = vmatprep.subr.mxu0 0.0
    %190 = vmatpush1.msra.mxu0 0.0
    %191 = vmatprep.subr.mxu0 0.0
    %192 = vmatpush1.msra.mxu0 0.0
    %193 = vmatprep.subr.mxu0 0.0
    %194 = vmatpush1.msra.mxu0 0.0
    %195 = vmatprep.subr.mxu0 0.0
    %196 = vmatpush1.msra.mxu0 0.0
    %197 = vmatprep.subr.mxu0 0.0
    %198 = vmatpush1.msra.mxu0 0.0
    %199 = vmatprep.subr.mxu0 0.0
    %200 = vmatpush1.msra.mxu0 0.0
    %201 = vmatprep.subr.mxu0 0.0
    %202 = vmatpush1.msra.mxu0 0.0
    %203 = vmatprep.subr.mxu0 0.0
    %204 = vmatpush1.msra.mxu0 0.0
    %205 = vmatprep.subr.mxu0 0.0
    %206 = vmatpush1.msra.mxu0 0.0
    %207 = vmatprep.subr.mxu0 0.0
    %208 = vmatpush1.msra.mxu0 0.0
    %209 = vmatprep.subr.mxu0 0.0
    %210 = vmatpush1.msra.mxu0 0.0
    %211 = vmatprep.subr.mxu0 0.0
    %212 = vmatpush1.msra.mxu0 0.0
    %213 = vmatprep.subr.mxu0 0.0
    %214 = vmatpush1.msra.mxu0 0.0
    %215 = vmatprep.subr.mxu0 0.0
    %216 = vmatpush1.msra.mxu0 0.0
    %217 = vmatprep.subr.mxu0 0.0
    %218 = vmatpush1.msra.mxu0 0.0
    %219 = vmatprep.subr.mxu0 0.0
    %220 = vmatpush1.msra.mxu0 0.0
    %221 = vmatprep.subr.mxu0 0.0
    %222 = vmatpush1.msra.mxu0 0.0
    %223 = vmatprep.subr.mxu0 0.0
    %224 = vmatpush1.msra.mxu0 0.0
    %225 = vmatprep.subr.mxu0 0.0
    %226 = vmatpush1.msra.mxu0 0.0
    %227 = vmatprep.subr.mxu0 0.0
    %228 = vmatpush1.msra.mxu0 0.0
    %229 = vmatprep.subr.mxu0 0.0
    %230 = vmatpush1.msra.mxu0 0.0
    %231 = vmatprep.mubr.f32.mxu0 0.0
    %232 = vmatmul.mubr.f32.gmra.mrb[0].mxu0 %v165
    %v233 = vpop.f32.mrb[0].mxu0
    %v234 = vadd.f32 %v161, %v233
    %v235 = vpop.f32.mrb[0].mxu0
    %236 = vdwg.mxu0
    %v237 = vmax.f32 %v234, 0.0
    %vm238 = vcmp.ne.f32.partialorder %v234, %v234
    %v239 = vadd.f32 %v234, 0.0
    %v240 = vand.u32 2147483647, %v234
    %v241 = vsub.f32 0.0, %v240
    %v242 = vmul.f32 %v241, 1.442695
    %v243 = vpow.pop %v242
    %v244 = vadd.f32 %v243, 1.0
    %v245 = vlog2.pop %v244
    %v246 = vmul.f32 %v245, 0.6931472
    %v247 = vmul.f32 -0.5, %v243
    %v248 = vadd.f32 %v247, 1.0
    %v249 = vmul.f32 %v248, %v243
    %v250 = vand.u32 2147483647, %v243
    %vm251 = vcmp.lt.f32.partialorder %v250, 0.0004427343
    %v252 = vsel %vm251, %v249, %v246
    %v253 = vadd.f32 %v237, %v252
    %v254 = vsel %vm238, %v239, %v253
    %v255 = vld [vmem:[%s5] sm:$0xf]
    %v257 = vrot.slane %v255, 4
    %v259 = vmul.f32 %v254, %v257
    %v261 = vrot.slane %v259, 4
    %v263 = vadd.f32 %v234, %v261
    %v264 = vmul.f32 %v255, -0.5
    %v265 = vmul.f32 %v264, %v255
    %v266 = vlog2.pop %v254
    %v267 = vmul.f32 %v266, 0.6931472
    %v269 = vrot.slane %v267, 4
    %v271 = vsub.f32 %v265, %v269
    %v272 = vsub.f32 %v271, 0.9189385
    %v273 = vtanh.pop %v263
    %v274 = vmul.f32 %v273, 2.0
    %v275 = vtanh.pop %v274
    %v276 = vmul.f32 %v275, %v275
    %v277 = vsub.f32 1.0, %v276
    %v278 = vadd.f32 %v277, 1e-07
    %v279 = vlog2.pop %v278
    %v280 = vmul.f32 %v279, 0.6931472
    %v281 = vsub.f32 %v272, %v280
    %vm282 = vcmask 60416
    %283 = vst.msk [vmem:[#allocation2] sm:$0xf] %vm282, %v274
    %284 = vst.msk [vmem:[#allocation2 + $0x4] sm:$0xf] %vm282, %v281
    // Predicated region
    $region26: #{tpu_custom_call.1} parent=1 // pred_check
      _
    $region27: #{tpu_custom_call.1} parent=1 // pred_check_branch
      %286 = sbr.rel (0) target = $region29
    $region28: #{tpu_custom_call.1} parent=1 // pred_region
      %s288 = ssub.s32 128, 128
      %289 = vsyncadd [#allocation3], %s288
      %s291 = sshll.u32 [#allocation2], 4
      %s292 = int_to_ptr.vmem [resolvable:$true] %s291
      %294 = dma.vmem_to_hbm [thread:$0]  %s292, 128, %s6, [#allocation3]
    $region29: #{tpu_custom_call.1} parent=1 // pred_fallthru
      _
    // Predicated region
    $region30: #{tpu_custom_call.1} parent=1 // pred_check
      _
    $region31: #{tpu_custom_call.1} parent=1 // pred_check_branch
      %296 = sbr.rel (0) target = $region33
    $region32: #{tpu_custom_call.1} parent=1 // pred_region
      %297 = dma.done [#allocation3], 128
    $region33: #{tpu_custom_call.1} parent=1 // pred_fallthru
      _
    %298 = vsyncpa [#allocation3], 1

</llo_original>
